<compile_context>
chip_gen: v5e
topology: v5e:2x2
jax: 0.10.0
libtpu: 0.0.40
codegen_flags: <defaults>
</compile_context>

<pallas_src>
import functools

import jax
import jax.numpy as jnp
from jax.experimental import pallas as pl
from jax.experimental.pallas import tpu as pltpu

LANE = 128
SUBLANE = 8
TM_MAX = 512  # batch-tile rows; multiple of 8, sized well under scoped VMEM on v5e/v6e/v7x


def _round_up(x, m):
    return ((x + m - 1) // m) * m


def actor_forward_kernel(x_ref, w1_ref, w2_ref, w3_ref, b_ref, out_ref):
    """One batch tile of the 3-layer MLP; all params VMEM-resident across the grid."""
    h_dim = w1_ref.shape[1]
    out_w = w3_ref.shape[1]          # act_dim padded to a multiple of 128 lanes

    x = x_ref[...]
    b1 = b_ref[0:1, :h_dim]
    b2 = b_ref[1:2, :h_dim]
    b3 = b_ref[2:3, :out_w]

    h1 = jnp.tanh(jnp.dot(x, w1_ref[...], preferred_element_type=jnp.float32) + b1)
    h2 = jnp.tanh(jnp.dot(h1, w2_ref[...], preferred_element_type=jnp.float32) + b2)
    logits = jnp.dot(h2, w3_ref[...], preferred_element_type=jnp.float32) + b3
    out_ref[...] = logits.astype(out_ref.dtype)


def pack_actor_params(w1, b1, w2, b2, w3, b3):
    """Pad layer3 to lane-dense width and pack the three biases into one array."""
    h_dim = w1.shape[1]
    act_dim = w3.shape[1]
    out_pad = _round_up(act_dim, LANE)
    bias_cols = max(out_pad, _round_up(h_dim, LANE))

    w3p = jnp.zeros((w3.shape[0], out_pad), w3.dtype).at[:, :act_dim].set(w3)
    b_packed = jnp.zeros((SUBLANE, bias_cols), jnp.float32)
    b_packed = b_packed.at[0, :h_dim].set(b1.reshape(-1))
    b_packed = b_packed.at[1, :h_dim].set(b2.reshape(-1))
    b_packed = b_packed.at[2, :act_dim].set(b3.reshape(-1))
    return w1, w2, w3p, b_packed


@functools.partial(jax.jit, static_argnames=("act_dim",))
def actor_forward(x, w1, w2, w3p, b_packed, *, act_dim):
    batch, obs_dim = x.shape
    h_dim = w1.shape[1]
    out_pad = w3p.shape[1]

    tm = min(TM_MAX, _round_up(batch, SUBLANE))
    grid = (pl.cdiv(batch, tm),)
    pinned = lambda i: (0, 0)

    cost = pl.CostEstimate(
        flops=2 * batch * (obs_dim * h_dim + h_dim * h_dim + h_dim * act_dim),
        transcendentals=2 * batch * h_dim,
        bytes_accessed=4 * (x.size + w1.size + w2.size + w3p.size
                            + b_packed.size + batch * out_pad),
    )

    out_padded = pl.pallas_call(
        actor_forward_kernel,
        out_shape=jax.ShapeDtypeStruct((batch, out_pad), jnp.float32),
        grid_spec=pltpu.PrefetchScalarGridSpec(
            num_scalar_prefetch=0,
            grid=grid,
            in_specs=[
                pl.BlockSpec((tm, obs_dim), lambda i: (i, 0)),   # batch-tiled activations
                pl.BlockSpec(w1.shape, pinned),                  # params stay resident
                pl.BlockSpec(w2.shape, pinned),
                pl.BlockSpec(w3p.shape, pinned),
                pl.BlockSpec(b_packed.shape, pinned),
            ],
            out_specs=pl.BlockSpec((tm, out_pad), lambda i: (i, 0)),
        ),
        compiler_params=pltpu.CompilerParams(
            dimension_semantics=("parallel",),   # megacore-shard the batch axis on v7x
        ),
        cost_estimate=cost,
    )(x, w1, w2, w3p, b_packed)

    # Drop the zero-padded lanes so callers see exactly the PyTorch logits shape.
    return out_padded[:, :act_dim]


def init_linear_params(key, in_features, out_features):
    """Deterministic PyTorch-style nn.Linear init: U(-1/sqrt(in), 1/sqrt(in))."""
    kw, kb = jax.random.split(key)
    bound = 1.0 / jnp.sqrt(jnp.float32(in_features))
    # Stored already transposed: [in_features, out_features], so y = x @ W + b.
    w = jax.random.uniform(kw, (in_features, out_features), jnp.float32,
                           minval=-bound, maxval=bound)
    b = jax.random.uniform(kb, (1, out_features), jnp.float32,
                           minval=-bound, maxval=bound)
    return w, b


def reference_forward(x, w1, b1, w2, b2, w3, b3):
    h1 = jnp.tanh(x @ w1 + b1)
    h2 = jnp.tanh(h1 @ w2 + b2)
    return h2 @ w3 + b3


if __name__ == "__main__":
    # Small shapes consistent with the module: obs_dim=16, h_dim=32, act_dim=4, batch=8.
    batch, obs_dim, h_dim, act_dim = 8, 16, 32, 4

    key = jax.random.PRNGKey(0)
    k_x, k1, k2, k3 = jax.random.split(key, 4)

    x = jax.random.normal(k_x, (batch, obs_dim), jnp.float32)
    w1, b1 = init_linear_params(k1, obs_dim, h_dim)
    w2, b2 = init_linear_params(k2, h_dim, h_dim)
    w3, b3 = init_linear_params(k3, h_dim, act_dim)

    pw1, pw2, pw3, pb = pack_actor_params(w1, b1, w2, b2, w3, b3)

    logits = actor_forward(x, pw1, pw2, pw3, pb, act_dim=act_dim)
    logits = jax.block_until_ready(logits)

    # Correctness check against a pure-JAX reference of the PyTorch module.
    ref = reference_forward(x, w1, b1, w2, b2, w3, b3)
    assert logits.shape == (batch, act_dim)
    assert jnp.allclose(logits, ref, atol=1e-5, rtol=1e-5), "mismatch vs reference"

    # TODO(synk): .policy()/.log_prob() (Categorical sampling / log_softmax) are
    # host-side distribution logic; a follow-up could fuse Gumbel-max sampling
    # (pltpu.prng_seed + pltpu.prng_random_bits + argmax) into this kernel so
    # only a per-row action index leaves VMEM.
    print("KERNEL_OK")
</pallas_src>

<mosaic_0001>
module attributes {stable_mosaic.version = 11 : i64} {
  func.func @actor_forward_kernel(%arg0: i32, %arg1: memref<8x16xf32, #tpu.memory_space<vmem>>, %arg2: memref<16x32xf32, #tpu.memory_space<vmem>>, %arg3: memref<32x32xf32, #tpu.memory_space<vmem>>, %arg4: memref<32x128xf32, #tpu.memory_space<vmem>>, %arg5: memref<8x128xf32, #tpu.memory_space<vmem>>, %arg6: memref<8x128xf32, #tpu.memory_space<vmem>>) attributes {dimension_semantics = [#tpu.dimension_semantics<parallel>], iteration_bounds = array<i64: 1>, scalar_prefetch = 0 : i64, scratch_operands = 0 : i64, tpu.core_type = #tpu.core_type<tc>, window_params = [{transform_indices = @transform_0, window_bounds = array<i64: 8, 16>}, {pipeline_mode = #tpu.pipeline_mode<synchronous>, transform_indices = @transform_1, window_bounds = array<i64: 16, 32>}, {pipeline_mode = #tpu.pipeline_mode<synchronous>, transform_indices = @transform_2, window_bounds = array<i64: 32, 32>}, {pipeline_mode = #tpu.pipeline_mode<synchronous>, transform_indices = @transform_3, window_bounds = array<i64: 32, 128>}, {pipeline_mode = #tpu.pipeline_mode<synchronous>, transform_indices = @transform_4, window_bounds = array<i64: 8, 128>}, {transform_indices = @transform_5, window_bounds = array<i64: 8, 128>}]} {
    %c0 = arith.constant 0 : index
    %c0_0 = arith.constant 0 : index
    %0 = vector.load %arg1[%c0, %c0_0] : memref<8x16xf32, #tpu.memory_space<vmem>>, vector<8x16xf32>
    %c0_1 = arith.constant 0 : index
    %c0_2 = arith.constant 0 : index
    %1 = vector.load %arg5[%c0_1, %c0_2] : memref<8x128xf32, #tpu.memory_space<vmem>>, vector<1x32xf32>
    %c1 = arith.constant 1 : index
    %c0_3 = arith.constant 0 : index
    %2 = vector.load %arg5[%c1, %c0_3] : memref<8x128xf32, #tpu.memory_space<vmem>>, vector<1x32xf32>
    %c2 = arith.constant 2 : index
    %c0_4 = arith.constant 0 : index
    %3 = vector.load %arg5[%c2, %c0_4] : memref<8x128xf32, #tpu.memory_space<vmem>>, vector<1x128xf32>
    %c0_5 = arith.constant 0 : index
    %c0_6 = arith.constant 0 : index
    %4 = vector.load %arg2[%c0_5, %c0_6] : memref<16x32xf32, #tpu.memory_space<vmem>>, vector<16x32xf32>
    %cst = arith.constant dense<0.000000e+00> : vector<8x32xf32>
    %5 = tpu.matmul %0, %4, %cst {dimension_numbers = #tpu.dot_dimension_numbers<[1], [0], [0], [1], [0, 0, 1, 1], [], []>} : vector<8x16xf32>, vector<16x32xf32>, vector<8x32xf32> -> vector<8x32xf32>
    %6 = vector.broadcast %1 : vector<1x32xf32> to vector<8x32xf32>
    %7 = arith.addf %5, %6 : vector<8x32xf32>
    %8 = math.tanh %7 : vector<8x32xf32>
    %c0_7 = arith.constant 0 : index
    %c0_8 = arith.constant 0 : index
    %9 = vector.load %arg3[%c0_7, %c0_8] : memref<32x32xf32, #tpu.memory_space<vmem>>, vector<32x32xf32>
    %cst_9 = arith.constant dense<0.000000e+00> : vector<8x32xf32>
    %10 = tpu.matmul %8, %9, %cst_9 {dimension_numbers = #tpu.dot_dimension_numbers<[1], [0], [0], [1], [0, 0, 1, 1], [], []>} : vector<8x32xf32>, vector<32x32xf32>, vector<8x32xf32> -> vector<8x32xf32>
    %11 = vector.broadcast %2 : vector<1x32xf32> to vector<8x32xf32>
    %12 = arith.addf %10, %11 : vector<8x32xf32>
    %13 = math.tanh %12 : vector<8x32xf32>
    %c0_10 = arith.constant 0 : index
    %c0_11 = arith.constant 0 : index
    %14 = vector.load %arg4[%c0_10, %c0_11] : memref<32x128xf32, #tpu.memory_space<vmem>>, vector<32x128xf32>
    %cst_12 = arith.constant dense<0.000000e+00> : vector<8x128xf32>
    %15 = tpu.matmul %13, %14, %cst_12 {dimension_numbers = #tpu.dot_dimension_numbers<[1], [0], [0], [1], [0, 0, 1, 1], [], []>} : vector<8x32xf32>, vector<32x128xf32>, vector<8x128xf32> -> vector<8x128xf32>
    %16 = vector.broadcast %3 : vector<1x128xf32> to vector<8x128xf32>
    %17 = arith.addf %15, %16 : vector<8x128xf32>
    %c0_13 = arith.constant 0 : index
    %c0_14 = arith.constant 0 : index
    %18 = vector.load %arg6[%c0_13, %c0_14] : memref<8x128xf32, #tpu.memory_space<vmem>>, vector<8x128xf32>
    tpu.vector_store %arg6[%c0_13, %c0_14], %17 {strides = array<i32>} : memref<8x128xf32, #tpu.memory_space<vmem>>, vector<8x128xf32>,
    return
  }
  func.func @transform_0(%arg0: i32) -> (i32, i32) {
    %c0_i32 = arith.constant 0 : i32
    %c0_i32_0 = arith.constant 0 : i32
    return %arg0, %c0_i32 : i32, i32
  }
  func.func @transform_1(%arg0: i32) -> (i32, i32) {
    %c0_i32 = arith.constant 0 : i32
    %c0_i32_0 = arith.constant 0 : i32
    %c0_i32_1 = arith.constant 0 : i32
    return %c0_i32, %c0_i32_0 : i32, i32
  }
  func.func @transform_2(%arg0: i32) -> (i32, i32) {
    %c0_i32 = arith.constant 0 : i32
    %c0_i32_0 = arith.constant 0 : i32
    %c0_i32_1 = arith.constant 0 : i32
    return %c0_i32, %c0_i32_0 : i32, i32
  }
  func.func @transform_3(%arg0: i32) -> (i32, i32) {
    %c0_i32 = arith.constant 0 : i32
    %c0_i32_0 = arith.constant 0 : i32
    %c0_i32_1 = arith.constant 0 : i32
    return %c0_i32, %c0_i32_0 : i32, i32
  }
  func.func @transform_4(%arg0: i32) -> (i32, i32) {
    %c0_i32 = arith.constant 0 : i32
    %c0_i32_0 = arith.constant 0 : i32
    %c0_i32_1 = arith.constant 0 : i32
    return %c0_i32, %c0_i32_0 : i32, i32
  }
  func.func @transform_5(%arg0: i32) -> (i32, i32) {
    %c0_i32 = arith.constant 0 : i32
    %c0_i32_0 = arith.constant 0 : i32
    return %arg0, %c0_i32 : i32, i32
  }
}

</mosaic_0001>

<llo_original>
// kernel: actor_forward.1
$region0: #{actor_forward.1}
  #allocation0 [shape = 'u32[]', space=smem, size = 0x4, offset = 0x4, fixed_abs, tag = 'smem constant byte address 0x4 - core index']
  #allocation1 [shape = 'u32[72,128]{1,0:T(1,128)}', space=vmem, size = 0x9000, scoped, tag = 'internal scratch']
  %s0 = inlined_call_operand.hbm [shape: f32[8,16], index: 0, kind: input, shape index: {}]
  %s1 = inlined_call_operand.hbm [shape: f32[16,32], index: 1, kind: input, shape index: {}]
  %s2 = inlined_call_operand.hbm [shape: f32[32,32], index: 2, kind: input, shape index: {}]
  %s3 = inlined_call_operand.hbm [shape: f32[32,128], index: 3, kind: input, shape index: {}]
  %s4 = inlined_call_operand.hbm [shape: f32[8,128], index: 4, kind: input, shape index: {}]
  %s5 = inlined_call_operand.vmem [shape: f32[8,128], index: 5, kind: output, shape index: {}]
  %s6 = sld [smem:[#allocation0]]
  $region50: #{actor_forward.1} parent=0
    _
  %s8 = ssub.s32 1, %s6
  %s9 = scalar_select 0, %s8, %s6
  $region1: #{actor_forward.1} parent=0
    #allocation2 [shape = 'u8[4096]{0}', space=vmem, size = 0x1000, scoped, tag = 'input window, operand 0, single buffered']
    #allocation3 [shape = 's32[1]{0}', space=sflag, size = 0x4, scoped, tag = 'scoped memory for actor_forward.1']
    #allocation4 [shape = 'u8[8192]{0}', space=vmem, size = 0x2000, scoped, tag = 'input window, operand 1, single buffered']
    #allocation5 [shape = 's32[1]{0}', space=sflag, size = 0x4, scoped, tag = 'scoped memory for actor_forward.1']
    #allocation6 [shape = 'u8[16384]{0}', space=vmem, size = 0x4000, scoped, tag = 'input window, operand 2, single buffered']
    #allocation7 [shape = 'u8[16384]{0}', space=vmem, size = 0x4000, scoped, tag = 'input window, operand 3, single buffered']
    #allocation8 [shape = 's32[1]{0}', space=sflag, size = 0x4, scoped, tag = 'scoped memory for actor_forward.1']
    #allocation9 [shape = 'u8[4096]{0}', space=vmem, size = 0x1000, scoped, tag = 'input window, operand 4, single buffered']
    %10 = vsyncpa [#allocation3], 0
    %11 = vsyncpa [#allocation5], 0
    %12 = vsyncpa [#allocation8], 0
    // Predicated region
    $region2: #{actor_forward.1} parent=1 // pred_check
      _
    $region3: #{actor_forward.1} parent=1 // pred_check_branch
      %14 = sbr.rel (0) target = $region5
    $region4: #{actor_forward.1} parent=1 // pred_region
      %16 = vsyncadd [#allocation3], 0
      %s18 = sshll.u32 %s0, 4
      %s19 = int_to_ptr.hbm [resolvable:$true] %s18
      %s20 = sshll.u32 [#allocation2], 4
      %s21 = int_to_ptr.vmem [resolvable:$true] %s20
      %23 = dma.hbm_to_vmem [thread:$0]  %s19, 128, %s21, [#allocation3]
    $region5: #{actor_forward.1} parent=1 // pred_fallthru
      _
    // Predicated region
    $region6: #{actor_forward.1} parent=1 // pred_check
      _
    $region7: #{actor_forward.1} parent=1 // pred_check_branch
      %25 = sbr.rel (0) target = $region9
    $region8: #{actor_forward.1} parent=1 // pred_region
      %27 = vsyncadd [#allocation5], 0
      %s28 = sshll.u32 %s1, 4
      %s29 = int_to_ptr.hbm [resolvable:$true] %s28
      %s30 = sshll.u32 [#allocation4], 4
      %s31 = int_to_ptr.vmem [resolvable:$true] %s30
      %36 = dma.hbm_to_vmem [thread:$0]  %s29, 256, %s31, [#allocation5], 128, 128, 8
    $region9: #{actor_forward.1} parent=1 // pred_fallthru
      _
    // Predicated region
    $region10: #{actor_forward.1} parent=1 // pred_check
      _
    $region11: #{actor_forward.1} parent=1 // pred_check_branch
      %38 = sbr.rel (0) target = $region13
    $region12: #{actor_forward.1} parent=1 // pred_region
      %40 = vsyncadd [#allocation5], 0
      %s41 = sshll.u32 %s2, 4
      %s42 = int_to_ptr.hbm [resolvable:$true] %s41
      %s43 = sshll.u32 [#allocation6], 4
      %s44 = int_to_ptr.vmem [resolvable:$true] %s43
      %49 = dma.hbm_to_vmem [thread:$0]  %s42, 512, %s44, [#allocation5], 128, 128, 8
    $region13: #{actor_forward.1} parent=1 // pred_fallthru
      _
    // Predicated region
    $region14: #{actor_forward.1} parent=1 // pred_check
      _
    $region15: #{actor_forward.1} parent=1 // pred_check_branch
      %51 = sbr.rel (0) target = $region17
    $region16: #{actor_forward.1} parent=1 // pred_region
      %53 = vsyncadd [#allocation8], 0
      %s54 = sshll.u32 %s3, 4
      %s55 = int_to_ptr.hbm [resolvable:$true] %s54
      %s56 = sshll.u32 [#allocation7], 4
      %s57 = int_to_ptr.vmem [resolvable:$true] %s56
      %62 = dma.hbm_to_vmem [thread:$0]  %s55, 512, %s57, [#allocation8], 128, 128, 8
    $region17: #{actor_forward.1} parent=1 // pred_fallthru
      _
    // Predicated region
    $region18: #{actor_forward.1} parent=1 // pred_check
      _
    $region19: #{actor_forward.1} parent=1 // pred_check_branch
      %64 = sbr.rel (0) target = $region21
    $region20: #{actor_forward.1} parent=1 // pred_region
      %66 = vsyncadd [#allocation8], 0
      %s68 = sshll.u32 %s4, 4
      %s69 = int_to_ptr.hbm [resolvable:$true] %s68
      %s70 = sshll.u32 [#allocation9], 4
      %s71 = int_to_ptr.vmem [resolvable:$true] %s70
      %73 = dma.hbm_to_vmem [thread:$0]  %s69, 128, %s71, [#allocation8]
    $region21: #{actor_forward.1} parent=1 // pred_fallthru
      _
    // Predicated region
    $region22: #{actor_forward.1} parent=1 // pred_check
      _
    $region23: #{actor_forward.1} parent=1 // pred_check_branch
      %75 = sbr.rel (0) target = $region25
    $region24: #{actor_forward.1} parent=1 // pred_region
      %77 = dma.done [#allocation3], 128
    $region25: #{actor_forward.1} parent=1 // pred_fallthru
      _
    // Predicated region
    $region26: #{actor_forward.1} parent=1 // pred_check
      _
    $region27: #{actor_forward.1} parent=1 // pred_check_branch
      %79 = sbr.rel (0) target = $region29
    $region28: #{actor_forward.1} parent=1 // pred_region
      %81 = dma.done [#allocation5], 256
    $region29: #{actor_forward.1} parent=1 // pred_fallthru
      _
    // Predicated region
    $region30: #{actor_forward.1} parent=1 // pred_check
      _
    $region31: #{actor_forward.1} parent=1 // pred_check_branch
      %83 = sbr.rel (0) target = $region33
    $region32: #{actor_forward.1} parent=1 // pred_region
      %85 = dma.done [#allocation5], 512
    $region33: #{actor_forward.1} parent=1 // pred_fallthru
      _
    // Predicated region
    $region34: #{actor_forward.1} parent=1 // pred_check
      _
    $region35: #{actor_forward.1} parent=1 // pred_check_branch
      %87 = sbr.rel (0) target = $region37
    $region36: #{actor_forward.1} parent=1 // pred_region
      %89 = dma.done [#allocation8], 512
    $region37: #{actor_forward.1} parent=1 // pred_fallthru
      _
    // Predicated region
    $region38: #{actor_forward.1} parent=1 // pred_check
      _
    $region39: #{actor_forward.1} parent=1 // pred_check_branch
      %91 = sbr.rel (0) target = $region41
    $region40: #{actor_forward.1} parent=1 // pred_region
      %93 = dma.done [#allocation8], 128
    $region41: #{actor_forward.1} parent=1 // pred_fallthru
      _
    %v94 = vld [vmem:[#allocation2] sm:$0xff]
    %v95 = vld [vmem:[#allocation9] sm:$0x1]
    %v96 = vld [vmem:[#allocation9 + $0x1] sm:$0x1]
    %v97 = vld [vmem:[#allocation9 + $0x2] sm:$0x1]
    %v98 = vld [vmem:[#allocation4] sm:$0xff]
    %v99 = vld [vmem:[#allocation4 + $0x8] sm:$0xff]
    %v100 = vperm.slane %v95, 0
    %vm101 = vcmask 130048
    %v103 = vsel %vm101, %v94, 0
    %105 = vmatpush.msra.mxu0 0.0
    %106 = vmatpush.msra.mxu0 0.0
    %107 = vmatpush.msra.mxu0 0.0
    %108 = vmatpush.msra.mxu0 0.0
    %109 = vmatpush.msra.mxu0 0.0
    %110 = vmatpush.msra.mxu0 0.0
    %111 = vmatpush.msra.mxu0 0.0
    %112 = vmatpush.msra.mxu0 0.0
    %113 = vmatpush.msra.mxu0 0.0
    %114 = vmatpush.msra.mxu0 0.0
    %115 = vmatpush.msra.mxu0 0.0
    %116 = vmatpush.msra.mxu0 0.0
    %117 = vmatpush.msra.mxu0 0.0
    %118 = vmatpush.msra.mxu0 0.0
    %119 = vmatpush.msra.mxu0 %v99
    %120 = vmatpush.msra.mxu0 %v98
    %121 = vmatmul.f32.gmra.mxu0 %v103
    %v122 = vpop.f32.mrf.mxu0
    %v123 = vadd.f32 %v100, %v122
    %124 = vdwg.mxu0
    %v125 = vtanh.pop %v123
    %v126 = vld [vmem:[#allocation6] sm:$0xff]
    %v127 = vld [vmem:[#allocation6 + $0x8] sm:$0xff]
    %v128 = vld [vmem:[#allocation6 + $0x10] sm:$0xff]
    %v129 = vld [vmem:[#allocation6 + $0x18] sm:$0xff]
    %v130 = vperm.slane %v96, 0
    %vm131 = vcmask 261120
    %v133 = vsel %vm131, %v125, 0
    %135 = vmatpush.msra.mxu0 0.0
    %136 = vmatpush.msra.mxu0 0.0
    %137 = vmatpush.msra.mxu0 0.0
    %138 = vmatpush.msra.mxu0 0.0
    %139 = vmatpush.msra.mxu0 0.0
    %140 = vmatpush.msra.mxu0 0.0
    %141 = vmatpush.msra.mxu0 0.0
    %142 = vmatpush.msra.mxu0 0.0
    %143 = vmatpush.msra.mxu0 0.0
    %144 = vmatpush.msra.mxu0 0.0
    %145 = vmatpush.msra.mxu0 0.0
    %146 = vmatpush.msra.mxu0 0.0
    %147 = vmatpush.msra.mxu0 %v129
    %148 = vmatpush.msra.mxu0 %v128
    %149 = vmatpush.msra.mxu0 %v127
    %150 = vmatpush.msra.mxu0 %v126
    %151 = vmatmul.f32.gmra.mxu0 %v133
    %v152 = vpop.f32.mrf.mxu0
    %v153 = vadd.f32 %v130, %v152
    %154 = vdwg.mxu0
    %v155 = vtanh.pop %v153
    %v156 = vld [vmem:[#allocation7] sm:$0xff]
    %v157 = vld [vmem:[#allocation7 + $0x8] sm:$0xff]
    %v158 = vld [vmem:[#allocation7 + $0x10] sm:$0xff]
    %v159 = vld [vmem:[#allocation7 + $0x18] sm:$0xff]
    %v160 = vperm.slane %v97, 0
    %v162 = vsel %vm131, %v155, 0
    %164 = vmatpush.msra.mxu0 0.0
    %165 = vmatpush.msra.mxu0 0.0
    %166 = vmatpush.msra.mxu0 0.0
    %167 = vmatpush.msra.mxu0 0.0
    %168 = vmatpush.msra.mxu0 0.0
    %169 = vmatpush.msra.mxu0 0.0
    %170 = vmatpush.msra.mxu0 0.0
    %171 = vmatpush.msra.mxu0 0.0
    %172 = vmatpush.msra.mxu0 0.0
    %173 = vmatpush.msra.mxu0 0.0
    %174 = vmatpush.msra.mxu0 0.0
    %175 = vmatpush.msra.mxu0 0.0
    %176 = vmatpush.msra.mxu0 %v159
    %177 = vmatpush.msra.mxu0 %v158
    %178 = vmatpush.msra.mxu0 %v157
    %179 = vmatpush.msra.mxu0 %v156
    %180 = vmatmul.f32.gmra.mxu0 %v162
    %v181 = vpop.f32.mrf.mxu0
    %v182 = vadd.f32 %v160, %v181
    %183 = vdwg.mxu0
    %184 = vst [vmem:[%s5] sm:$0xff] %v182
    // Predicated region
    $region42: #{actor_forward.1} parent=1 // pred_check
      _
    $region43: #{actor_forward.1} parent=1 // pred_check_branch
      %186 = sbr.rel (0) target = $region45
    $region44: #{actor_forward.1} parent=1 // pred_region
      _
    $region45: #{actor_forward.1} parent=1 // pred_fallthru
      _
    // Predicated region
    $region46: #{actor_forward.1} parent=1 // pred_check
      _
    $region47: #{actor_forward.1} parent=1 // pred_check_branch
      %188 = sbr.rel (0) target = $region49
    $region48: #{actor_forward.1} parent=1 // pred_region
      _
    $region49: #{actor_forward.1} parent=1 // pred_fallthru
      _
    %189 = vsyncpa [#allocation3], 1
    %190 = vsyncpa [#allocation5], 1
    %191 = vsyncpa [#allocation8], 1

</llo_original>
